<compile_context>
chip_gen: v7x
topology: tpu7x:2x2x1
jax: 0.10.0
libtpu: 0.0.40
codegen_flags: <defaults>
</compile_context>

<pallas_src>
import jax
import jax.numpy as jnp
from jax.experimental import pallas as pl
from jax.experimental.pallas import tpu as pltpu

DELTA = 0.6
GAMMA = 0.5
LMD = 0.5
EPS = 1e-8
LOG_CLAMP = -100.0   # PyTorch F.binary_cross_entropy clamps log() at -100

_LANES = 128
_SUB = 8             # f32 sublane tile
_ROW_ALIGN = 32      # covers f32 / bf16 / int8 sublane packing


def _round_up(a, b):
    return (a + b - 1) // b * b


def _pow_gamma(v):
    # (1 - pt + eps)^GAMMA; exact sqrt when GAMMA == 0.5, generic pow otherwise
    # (keeps kernel and reference in sync if the module constant changes).
    if GAMMA == 0.5:
        return jnp.sqrt(v)
    return jnp.power(v, GAMMA)


def _elementwise_terms(x, t, binary_targets):
    """Per-element (focal_raw, tp) in f32, shared by kernel and JAX tail.

    focal_raw = (1 - pt + eps)^gamma * (t*log(x) + (1-t)*log(1-x))
              = -(per-element focal term) / DELTA     (DELTA / sign in glue)
    tp        = x * t
    Logs are clamped at -100 BEFORE blending with t/(1-t) so exact 0/1 inputs
    never produce 0 * (-inf) NaNs.
    """
    if binary_targets:
        # Exact only for hard 0/1 targets: pt = x if t==1 else 1-x and
        # BCE = -max(log(pt), -100).  Saves one log and the two blends.
        pt = jnp.where(t >= 0.5, x, 1.0 - x)
        bce_neg = jnp.maximum(jnp.log(pt), LOG_CLAMP)
    else:
        pt = t * x + (1.0 - t) * (1.0 - x)
        log_x = jnp.maximum(jnp.log(x), LOG_CLAMP)
        log_1mx = jnp.maximum(jnp.log(1.0 - x), LOG_CLAMP)
        bce_neg = t * log_x + (1.0 - t) * log_1mx
    focal_raw = _pow_gamma(1.0 - pt + EPS) * bce_neg
    return focal_raw, x * t


def _make_kernel(eff_block, chunk_rows, binary_targets):
    """Kernel accumulating lane-parallel sums of [focal_raw, x*t, x, t]."""
    n_chunks = eff_block // chunk_rows
    rem_rows = eff_block % chunk_rows            # multiple of _ROW_ALIGN

    def _vreg_partial(v):
        # (rows, 128) -> (8, 128): tile-aligned reshape + pure-VPU add tree.
        # TODO(synk): on v7x (VALU-bound) this could go to the idle MXU via an
        # all-ones matmul reduce; skipped as lower priority than the cuts above.
        return jnp.sum(v.reshape(-1, _SUB, _LANES), axis=0)

    def kernel(x_ref, t_ref, acc_ref):
        @pl.when(pl.program_id(1) == 0)
        def _init():
            acc_ref[...] = jnp.zeros_like(acc_ref)

        def chunk_sums(r0, nrows):
            x = x_ref[pl.ds(r0, nrows), :].astype(jnp.float32)
            t = t_ref[pl.ds(r0, nrows), :].astype(jnp.float32)
            focal_raw, tp = _elementwise_terms(x, t, binary_targets)
            return (_vreg_partial(focal_raw), _vreg_partial(tp),
                    _vreg_partial(x), _vreg_partial(t))

        zero = jnp.zeros((_SUB, _LANES), jnp.float32)
        carry = (zero, zero, zero, zero)

        if n_chunks > 0:
            def body(c, acc):
                r0 = pl.multiple_of(c * chunk_rows, chunk_rows)
                s = chunk_sums(r0, chunk_rows)
                return tuple(a + b for a, b in zip(acc, s))
            carry = jax.lax.fori_loop(0, n_chunks, body, carry)

        if rem_rows > 0:
            s = chunk_sums(n_chunks * chunk_rows, rem_rows)
            carry = tuple(a + b for a, b in zip(carry, s))

        acc_ref[0] += carry[0]
        acc_ref[1] += carry[1]
        acc_ref[2] += carry[2]
        acc_ref[3] += carry[3]

    return kernel


def _default_num_parallel():
    # Only multi-TensorCore chips (v7x) benefit from a >1 leading grid axis;
    # on single-TC v5e/v6e it would just add an extra outer iteration.
    try:
        kind = jax.devices()[0].device_kind.lower()
    except Exception:
        return 1
    return 2 if "v7" in kind else 1


def _jax_sums(x, t, binary_targets):
    x = x.astype(jnp.float32)
    t = t.astype(jnp.float32)
    focal_raw, tp = _elementwise_terms(x, t, binary_targets)
    return jnp.stack([jnp.sum(focal_raw), jnp.sum(tp), jnp.sum(x), jnp.sum(t)])


def _combine(sums, total):
    """sums = [sum(focal_raw), sum(x*t), sum(x), sum(t)] -> scalar loss."""
    sum_focal_raw, sum_tp, sum_x, sum_t = sums[0], sums[1], sums[2], sums[3]
    l_mf = -DELTA * sum_focal_raw / jnp.float32(total)       # mean focal term
    denom = DELTA * sum_x + (1.0 - DELTA) * sum_t             # exact identity
    m_ti = sum_tp / denom                                     # modified Tversky
    l_mft = jnp.power(1.0 - m_ti, GAMMA)
    return LMD * l_mf + (1.0 - LMD) * l_mft


def ufl_sym_loss(inp, target, *, block_rows=4096, chunk_rows=256,
                 num_parallel=None, binary_targets=False):
    """Forward pass matching PyTorch UFLSymLoss.

    binary_targets=True enables an exact fast path for hard 0/1 masks; keep
    False for soft labels.  Feed bf16 probabilities / bf16 masks where
    available: the kernel casts to f32 internally, so narrow inputs just halve
    HBM traffic (the hot bytes on v5e/v6e).
    """
    assert inp.shape == target.shape
    total = int(inp.size)

    x_flat = inp.reshape(-1)
    t_flat = target.reshape(-1)

    rows = total // _LANES
    rows32 = (rows // _ROW_ALIGN) * _ROW_ALIGN

    if num_parallel is None:
        num_parallel = _default_num_parallel()
    chunk_rows = max(_ROW_ALIGN, _round_up(chunk_rows, _ROW_ALIGN))

    if rows32 == 0:
        # Tiny input: not worth a kernel launch.
        return _combine(_jax_sums(x_flat, t_flat, binary_targets), total)

    eff_block = min(_round_up(block_rows, _ROW_ALIGN), rows32)
    p = num_parallel if (num_parallel > 1 and rows32 >= num_parallel * eff_block) else 1
    inner = rows32 // (p * eff_block)
    main_rows = p * inner * eff_block
    main_elems = main_rows * _LANES

    # Lane-dense [rows, 128] view.  Free reshape when total % 128 == 0 (the
    # normal NCHW case); otherwise a single prefix slice — still cheaper than
    # padding the whole tensor, and the tail goes through the JAX path below.
    if total % _LANES == 0:
        x2d = x_flat.reshape(rows, _LANES)
        t2d = t_flat.reshape(rows, _LANES)
    else:
        x2d = x_flat[:main_elems].reshape(main_rows, _LANES)
        t2d = t_flat[:main_elems].reshape(main_rows, _LANES)

    n_logs = 1 if binary_targets else 2
    cost = pl.CostEstimate(
        flops=16 * main_elems,
        transcendentals=(n_logs + 1) * main_elems,
        bytes_accessed=int(main_rows * _LANES *
                           (x2d.dtype.itemsize + t2d.dtype.itemsize)
                           + p * 4 * _SUB * _LANES * 4),
    )

    kernel = _make_kernel(eff_block, chunk_rows, binary_targets)

    partials = pl.pallas_call(
        kernel,
        out_shape=jax.ShapeDtypeStruct((p * 4, _SUB, _LANES), jnp.float32),
        grid_spec=pltpu.PrefetchScalarGridSpec(
            num_scalar_prefetch=0,
            grid=(p, inner),
            in_specs=[
                pl.BlockSpec((eff_block, _LANES),
                             lambda pi, ii: (pi * inner + ii, 0)),
                pl.BlockSpec((eff_block, _LANES),
                             lambda pi, ii: (pi * inner + ii, 0)),
            ],
            out_specs=pl.BlockSpec((4, _SUB, _LANES), lambda pi, ii: (pi, 0, 0)),
        ),
        compiler_params=pltpu.CompilerParams(
            # TODO(synk): on v7x verify in the trace that the leading axis is
            # megacore-sharded; switch to pltpu.CORE_PARALLEL if it is not.
            dimension_semantics=("parallel", "arbitrary"),
            vmem_limit_bytes=32 * 1024 * 1024,
        ),
        cost_estimate=cost,
    )(x2d, t2d)

    sums = jnp.sum(partials.reshape(p, 4, _SUB * _LANES), axis=(0, 2))   # (4,)

    # Remainder (< ~one row block + a <128-element tail): identical per-element
    # math in plain JAX, folded into the partial sums.  Accumulation order
    # differs slightly from a monolithic XLA reduce (f32 loss tolerance ~1e-5).
    if main_elems < total:
        sums = sums + _jax_sums(x_flat[main_elems:], t_flat[main_elems:],
                                binary_targets)

    return _combine(sums, total)


def ufl_sym_loss_ref(inp, target):
    """Pure-JAX reference mirroring the PyTorch forward."""
    x = inp.astype(jnp.float32)
    t = target.astype(jnp.float32)
    pt = t * x + (1 - t) * (1 - x)
    log_x = jnp.maximum(jnp.log(x), LOG_CLAMP)
    log_1mx = jnp.maximum(jnp.log(1 - x), LOG_CLAMP)
    bce = -(t * log_x + (1 - t) * log_1mx)
    l_mf = jnp.mean(DELTA * jnp.power(1 - pt + EPS, GAMMA) * bce)
    num = jnp.sum(x * t)
    den = jnp.sum(x * t + DELTA * (x * (1 - t)) + (1 - DELTA) * ((1 - x) * t))
    m_ti = num / den
    l_mft = jnp.power(1 - m_ti, GAMMA)
    return LMD * l_mf + (1 - LMD) * l_mft


if __name__ == "__main__":
    key = jax.random.PRNGKey(0)
    k1, k2, k3, k4, k5, k6 = jax.random.split(key, 6)

    # Case A: general (soft-label-capable) path, f32 probabilities + f32 mask.
    shape_a = (2, 4, 32, 32)
    inp_a = jax.nn.sigmoid(jax.random.normal(k1, shape_a, dtype=jnp.float32))
    tgt_a = (jax.random.uniform(k2, shape_a) > 0.5).astype(jnp.float32)
    loss_a = jax.block_until_ready(ufl_sym_loss(inp_a, tgt_a))
    ref_a = jax.block_until_ready(ufl_sym_loss_ref(inp_a, tgt_a))
    assert jnp.allclose(loss_a, ref_a, rtol=3e-5, atol=1e-6), (loss_a, ref_a)

    # Case B: binary fast path, bf16 mask (exact for 0/1), total not a
    # multiple of 128 -> exercises the JAX element-tail path.
    shape_b = (2, 4, 33, 47)
    inp_b = jax.nn.sigmoid(jax.random.normal(k3, shape_b, dtype=jnp.float32))
    tgt_b = (jax.random.uniform(k4, shape_b) > 0.5).astype(jnp.bfloat16)
    loss_b = jax.block_until_ready(ufl_sym_loss(inp_b, tgt_b, binary_targets=True))
    ref_b = jax.block_until_ready(ufl_sym_loss_ref(inp_b, tgt_b))
    assert jnp.allclose(loss_b, ref_b, rtol=3e-5, atol=1e-6), (loss_b, ref_b)

    # Case C: small blocks to exercise multi-step grid accumulation and the
    # in-kernel chunk fori_loop (and the 2-core split on v7x).
    shape_c = (2, 4, 64, 64)
    inp_c = jax.nn.sigmoid(jax.random.normal(k5, shape_c, dtype=jnp.float32))
    tgt_c = (jax.random.uniform(k6, shape_c) > 0.5).astype(jnp.float32)
    loss_c = jax.block_until_ready(
        ufl_sym_loss(inp_c, tgt_c, block_rows=64, chunk_rows=32))
    ref_c = jax.block_until_ready(ufl_sym_loss_ref(inp_c, tgt_c))
    assert jnp.allclose(loss_c, ref_c, rtol=3e-5, atol=1e-6), (loss_c, ref_c)

    print("KERNEL_OK")
</pallas_src>

<mosaic_0001>
module attributes {stable_mosaic.version = 11 : i64} {
  func.func @kernel(%arg0: i32, %arg1: i32, %arg2: memref<64x128xf32, #tpu.memory_space<vmem>>, %arg3: memref<64x128xf32, #tpu.memory_space<vmem>>, %arg4: memref<4x8x128xf32, #tpu.memory_space<vmem>>) attributes {dimension_semantics = [#tpu.dimension_semantics<parallel>, #tpu.dimension_semantics<arbitrary>], iteration_bounds = array<i64: 1, 1>, scalar_prefetch = 0 : i64, scratch_operands = 0 : i64, tpu.core_type = #tpu.core_type<tc>, window_params = [{transform_indices = @transform_0, window_bounds = array<i64: 64, 128>}, {transform_indices = @transform_1, window_bounds = array<i64: 64, 128>}, {transform_indices = @transform_2, window_bounds = array<i64: 4, 8, 128>}]} {
    %c0_i32 = arith.constant 0 : i32
    %0 = arith.cmpi eq, %arg1, %c0_i32 : i32
    %1 = arith.extui %0 : i1 to i32
    %c0_i32_0 = arith.constant 0 : i32
    %2 = arith.cmpi ne, %1, %c0_i32_0 : i32
    scf.if %2 {
      %cst_37 = arith.constant 0.000000e+00 : f32
      %69 = vector.broadcast %cst_37 : f32 to vector<4x8x128xf32>
      %c0_38 = arith.constant 0 : index
      %c0_39 = arith.constant 0 : index
      %c0_40 = arith.constant 0 : index
      %70 = vector.load %arg4[%c0_38, %c0_39, %c0_40] : memref<4x8x128xf32, #tpu.memory_space<vmem>>, vector<4x8x128xf32>
      tpu.vector_store %arg4[%c0_38, %c0_39, %c0_40], %69 {strides = array<i32>} : memref<4x8x128xf32, #tpu.memory_space<vmem>>, vector<4x8x128xf32>,
    } else {
    }
    %cst = arith.constant 0.000000e+00 : f32
    %3 = vector.broadcast %cst : f32 to vector<8x128xf32>
    %c0 = arith.constant 0 : index
    %c0_1 = arith.constant 0 : index
    %4 = vector.load %arg2[%c0, %c0_1] : memref<64x128xf32, #tpu.memory_space<vmem>>, vector<64x128xf32>
    %c0_2 = arith.constant 0 : index
    %c0_3 = arith.constant 0 : index
    %5 = vector.load %arg3[%c0_2, %c0_3] : memref<64x128xf32, #tpu.memory_space<vmem>>, vector<64x128xf32>
    %6 = arith.mulf %5, %4 : vector<64x128xf32>
    %cst_4 = arith.constant 1.000000e+00 : f32
    %7 = vector.broadcast %cst_4 : f32 to vector<64x128xf32>
    %8 = arith.subf %7, %5 : vector<64x128xf32>
    %cst_5 = arith.constant 1.000000e+00 : f32
    %9 = vector.broadcast %cst_5 : f32 to vector<64x128xf32>
    %10 = arith.subf %9, %4 : vector<64x128xf32>
    %11 = arith.mulf %8, %10 : vector<64x128xf32>
    %12 = arith.addf %6, %11 : vector<64x128xf32>
    %13 = math.log %4 : vector<64x128xf32>
    %cst_6 = arith.constant -1.000000e+02 : f32
    %14 = vector.broadcast %cst_6 : f32 to vector<64x128xf32>
    %15 = arith.maximumf %13, %14 : vector<64x128xf32>
    %cst_7 = arith.constant 1.000000e+00 : f32
    %16 = vector.broadcast %cst_7 : f32 to vector<64x128xf32>
    %17 = arith.subf %16, %4 : vector<64x128xf32>
    %18 = math.log %17 : vector<64x128xf32>
    %cst_8 = arith.constant -1.000000e+02 : f32
    %19 = vector.broadcast %cst_8 : f32 to vector<64x128xf32>
    %20 = arith.maximumf %18, %19 : vector<64x128xf32>
    %21 = arith.mulf %5, %15 : vector<64x128xf32>
    %cst_9 = arith.constant 1.000000e+00 : f32
    %22 = vector.broadcast %cst_9 : f32 to vector<64x128xf32>
    %23 = arith.subf %22, %5 : vector<64x128xf32>
    %24 = arith.mulf %23, %20 : vector<64x128xf32>
    %25 = arith.addf %21, %24 : vector<64x128xf32>
    %cst_10 = arith.constant 1.000000e+00 : f32
    %26 = vector.broadcast %cst_10 : f32 to vector<64x128xf32>
    %27 = arith.subf %26, %12 : vector<64x128xf32>
    %cst_11 = arith.constant 9.99999993E-9 : f32
    %28 = vector.broadcast %cst_11 : f32 to vector<64x128xf32>
    %29 = arith.addf %27, %28 : vector<64x128xf32>
    %30 = math.sqrt %29 : vector<64x128xf32>
    %31 = arith.mulf %30, %25 : vector<64x128xf32>
    %32 = arith.mulf %4, %5 : vector<64x128xf32>
    %33 = vector.shape_cast %31 : vector<64x128xf32> to vector<8x8x128xf32>
    %cst_12 = arith.constant dense<0.000000e+00> : vector<8x128xf32>
    %34 = vector.multi_reduction <add>, %33, %cst_12 [0] : vector<8x8x128xf32> to vector<8x128xf32>
    %35 = vector.shape_cast %32 : vector<64x128xf32> to vector<8x8x128xf32>
    %cst_13 = arith.constant dense<0.000000e+00> : vector<8x128xf32>
    %36 = vector.multi_reduction <add>, %35, %cst_13 [0] : vector<8x8x128xf32> to vector<8x128xf32>
    %37 = vector.shape_cast %4 : vector<64x128xf32> to vector<8x8x128xf32>
    %cst_14 = arith.constant dense<0.000000e+00> : vector<8x128xf32>
    %38 = vector.multi_reduction <add>, %37, %cst_14 [0] : vector<8x8x128xf32> to vector<8x128xf32>
    %39 = vector.shape_cast %5 : vector<64x128xf32> to vector<8x8x128xf32>
    %cst_15 = arith.constant dense<0.000000e+00> : vector<8x128xf32>
    %40 = vector.multi_reduction <add>, %39, %cst_15 [0] : vector<8x8x128xf32> to vector<8x128xf32>
    %41 = arith.addf %3, %34 : vector<8x128xf32>
    %42 = arith.addf %3, %36 : vector<8x128xf32>
    %43 = arith.addf %3, %38 : vector<8x128xf32>
    %44 = arith.addf %3, %40 : vector<8x128xf32>
    %c0_16 = arith.constant 0 : index
    %c0_17 = arith.constant 0 : index
    %c0_18 = arith.constant 0 : index
    %45 = vector.load %arg4[%c0_16, %c0_17, %c0_18] : memref<4x8x128xf32, #tpu.memory_space<vmem>>, vector<1x8x128xf32>
    %46 = vector.shape_cast %45 : vector<1x8x128xf32> to vector<8x128xf32>
    %47 = arith.addf %46, %41 : vector<8x128xf32>
    %c0_19 = arith.constant 0 : index
    %c0_20 = arith.constant 0 : index
    %c0_21 = arith.constant 0 : index
    %48 = vector.load %arg4[%c0_19, %c0_20, %c0_21] : memref<4x8x128xf32, #tpu.memory_space<vmem>>, vector<1x8x128xf32>
    %49 = vector.shape_cast %48 : vector<1x8x128xf32> to vector<8x128xf32>
    %50 = vector.shape_cast %47 : vector<8x128xf32> to vector<1x8x128xf32>
    tpu.vector_store %arg4[%c0_19, %c0_20, %c0_21], %50 {strides = array<i32>} : memref<4x8x128xf32, #tpu.memory_space<vmem>>, vector<1x8x128xf32>,
    %c1 = arith.constant 1 : index
    %c0_22 = arith.constant 0 : index
    %c0_23 = arith.constant 0 : index
    %51 = vector.load %arg4[%c1, %c0_22, %c0_23] : memref<4x8x128xf32, #tpu.memory_space<vmem>>, vector<1x8x128xf32>
    %52 = vector.shape_cast %51 : vector<1x8x128xf32> to vector<8x128xf32>
    %53 = arith.addf %52, %42 : vector<8x128xf32>
    %c1_24 = arith.constant 1 : index
    %c0_25 = arith.constant 0 : index
    %c0_26 = arith.constant 0 : index
    %54 = vector.load %arg4[%c1_24, %c0_25, %c0_26] : memref<4x8x128xf32, #tpu.memory_space<vmem>>, vector<1x8x128xf32>
    %55 = vector.shape_cast %54 : vector<1x8x128xf32> to vector<8x128xf32>
    %56 = vector.shape_cast %53 : vector<8x128xf32> to vector<1x8x128xf32>
    tpu.vector_store %arg4[%c1_24, %c0_25, %c0_26], %56 {strides = array<i32>} : memref<4x8x128xf32, #tpu.memory_space<vmem>>, vector<1x8x128xf32>,
    %c2 = arith.constant 2 : index
    %c0_27 = arith.constant 0 : index
    %c0_28 = arith.constant 0 : index
    %57 = vector.load %arg4[%c2, %c0_27, %c0_28] : memref<4x8x128xf32, #tpu.memory_space<vmem>>, vector<1x8x128xf32>
    %58 = vector.shape_cast %57 : vector<1x8x128xf32> to vector<8x128xf32>
    %59 = arith.addf %58, %43 : vector<8x128xf32>
    %c2_29 = arith.constant 2 : index
    %c0_30 = arith.constant 0 : index
    %c0_31 = arith.constant 0 : index
    %60 = vector.load %arg4[%c2_29, %c0_30, %c0_31] : memref<4x8x128xf32, #tpu.memory_space<vmem>>, vector<1x8x128xf32>
    %61 = vector.shape_cast %60 : vector<1x8x128xf32> to vector<8x128xf32>
    %62 = vector.shape_cast %59 : vector<8x128xf32> to vector<1x8x128xf32>
    tpu.vector_store %arg4[%c2_29, %c0_30, %c0_31], %62 {strides = array<i32>} : memref<4x8x128xf32, #tpu.memory_space<vmem>>, vector<1x8x128xf32>,
    %c3 = arith.constant 3 : index
    %c0_32 = arith.constant 0 : index
    %c0_33 = arith.constant 0 : index
    %63 = vector.load %arg4[%c3, %c0_32, %c0_33] : memref<4x8x128xf32, #tpu.memory_space<vmem>>, vector<1x8x128xf32>
    %64 = vector.shape_cast %63 : vector<1x8x128xf32> to vector<8x128xf32>
    %65 = arith.addf %64, %44 : vector<8x128xf32>
    %c3_34 = arith.constant 3 : index
    %c0_35 = arith.constant 0 : index
    %c0_36 = arith.constant 0 : index
    %66 = vector.load %arg4[%c3_34, %c0_35, %c0_36] : memref<4x8x128xf32, #tpu.memory_space<vmem>>, vector<1x8x128xf32>
    %67 = vector.shape_cast %66 : vector<1x8x128xf32> to vector<8x128xf32>
    %68 = vector.shape_cast %65 : vector<8x128xf32> to vector<1x8x128xf32>
    tpu.vector_store %arg4[%c3_34, %c0_35, %c0_36], %68 {strides = array<i32>} : memref<4x8x128xf32, #tpu.memory_space<vmem>>, vector<1x8x128xf32>,
    return
  }
  func.func @transform_0(%arg0: i32, %arg1: i32) -> (i32, i32) {
    %c1_i32 = arith.constant 1 : i32
    %0 = arith.muli %arg0, %c1_i32 : i32
    %1 = arith.addi %0, %arg1 : i32
    %c0_i32 = arith.constant 0 : i32
    %c0_i32_0 = arith.constant 0 : i32
    return %1, %c0_i32 : i32, i32
  }
  func.func @transform_1(%arg0: i32, %arg1: i32) -> (i32, i32) {
    %c1_i32 = arith.constant 1 : i32
    %0 = arith.muli %arg0, %c1_i32 : i32
    %1 = arith.addi %0, %arg1 : i32
    %c0_i32 = arith.constant 0 : i32
    %c0_i32_0 = arith.constant 0 : i32
    return %1, %c0_i32 : i32, i32
  }
  func.func @transform_2(%arg0: i32, %arg1: i32) -> (i32, i32, i32) {
    %c0_i32 = arith.constant 0 : i32
    %c0_i32_0 = arith.constant 0 : i32
    %c0_i32_1 = arith.constant 0 : i32
    return %arg0, %c0_i32, %c0_i32_0 : i32, i32, i32
  }
}

</mosaic_0001>

<llo_original>
// kernel: tpu_custom_call.1
$region0: #{tpu_custom_call.1}
  #allocation0 [shape = 'u32[]', space=smem, size = 0x4, offset = 0x4, fixed_abs, tag = 'smem constant byte address 0x4 - core index']
  #allocation1 [shape = 'u32[144,128]{1,0:T(1,128)}', space=vmem, size = 0x12000, scoped, tag = 'internal scratch']
  %s0 = inlined_call_operand.hbm [shape: f32[64,128], index: 0, kind: input, shape index: {}]
  %s1 = inlined_call_operand.hbm [shape: f32[64,128], index: 1, kind: input, shape index: {}]
  %s2 = inlined_call_operand.hbm [shape: f32[4,8,128], index: 2, kind: output, shape index: {}]
  %s3 = sld [smem:[#allocation0]]
  $region30: #{tpu_custom_call.1} parent=0
    _
  %s5 = ssub.s32 1, %s3
  %s6 = scalar_select 0, %s5, %s3
  $region1: #{tpu_custom_call.1} parent=0
    #allocation2 [shape = 'u8[32768]{0}', space=vmem, size = 0x8000, scoped, tag = 'input window, operand 0, single buffered']
    #allocation3 [shape = 's32[1]{0}', space=sflag, size = 0x4, scoped, tag = 'scoped memory for tpu_custom_call.1']
    #allocation4 [shape = 's32[1]{0}', space=sflag, size = 0x4, scoped, tag = 'scoped memory for tpu_custom_call.1']
    #allocation5 [shape = 'u8[32768]{0}', space=vmem, size = 0x8000, scoped, tag = 'input window, operand 1, single buffered']
    #allocation6 [shape = 's32[1]{0}', space=sflag, size = 0x4, scoped, tag = 'scoped memory for tpu_custom_call.1']
    #allocation7 [shape = 'u8[16384]{0}', space=vmem, size = 0x4000, scoped, tag = 'output window, operand 0, single buffered']
    %7 = vsyncpa [#allocation3], 0
    %8 = vsyncpa [#allocation6], 0
    %9 = vsyncpa [#allocation4], 0
    // Predicated region
    $region2: #{tpu_custom_call.1} parent=1 // pred_check
      _
    $region3: #{tpu_custom_call.1} parent=1 // pred_check_branch
      %11 = sbr.rel (0) target = $region5
    $region4: #{tpu_custom_call.1} parent=1 // pred_region
      %s12 = sadd.s32 0, 0
      %s13 = smul.u32 8, %s12
      %s15 = ssub.s32 1024, 1024
      %16 = vsyncadd [#allocation3], %s15
      %s17 = smul.addr %s13, 128
      %s18 = scalar_lea.hbm %s0, %s17
      %s19 = sshll.u32 [#allocation2], 4
      %s20 = int_to_ptr.vmem [resolvable:$true] %s19
      %25 = dma.hbm_to_vmem [thread:$0]  %s18, 1024, %s20, [#allocation3], 128, 128, 8
    $region5: #{tpu_custom_call.1} parent=1 // pred_fallthru
      _
    // Predicated region
    $region6: #{tpu_custom_call.1} parent=1 // pred_check
      _
    $region7: #{tpu_custom_call.1} parent=1 // pred_check_branch
      %27 = sbr.rel (0) target = $region9
    $region8: #{tpu_custom_call.1} parent=1 // pred_region
      %s28 = sadd.s32 0, 0
      %s29 = smul.u32 8, %s28
      %s31 = ssub.s32 1024, 1024
      %32 = vsyncadd [#allocation6], %s31
      %s33 = smul.addr %s29, 128
      %s34 = scalar_lea.hbm %s1, %s33
      %s35 = sshll.u32 [#allocation5], 4
      %s36 = int_to_ptr.vmem [resolvable:$true] %s35
      %41 = dma.hbm_to_vmem [thread:$0]  %s34, 1024, %s36, [#allocation6], 128, 128, 8
    $region9: #{tpu_custom_call.1} parent=1 // pred_fallthru
      _
    // Predicated region
    $region10: #{tpu_custom_call.1} parent=1 // pred_check
      _
    $region11: #{tpu_custom_call.1} parent=1 // pred_check_branch
      %43 = sbr.rel (0) target = $region13
    $region12: #{tpu_custom_call.1} parent=1 // pred_region
      %44 = dma.done [#allocation3], 1024
    $region13: #{tpu_custom_call.1} parent=1 // pred_fallthru
      _
    // Predicated region
    $region14: #{tpu_custom_call.1} parent=1 // pred_check
      _
    $region15: #{tpu_custom_call.1} parent=1 // pred_check_branch
      %46 = sbr.rel (0) target = $region17
    $region16: #{tpu_custom_call.1} parent=1 // pred_region
      %47 = dma.done [#allocation6], 1024
    $region17: #{tpu_custom_call.1} parent=1 // pred_fallthru
      _
    %s48 = sadd.s32 0, 0
    %s49 = smul.u32 8, %s48
    %s50 = sadd.s32 0, 0
    %s51 = smul.u32 8, %s50
    %p52 = scmp.eq.s32.totalorder 0, 0
    // Predicated region
    $region18: #{tpu_custom_call.1} parent=1 // pred_check
      %p53 = pneg %p52
    $region19: #{tpu_custom_call.1} parent=1 // pred_check_branch
      %55 = sbr.rel (%p53) target = $region21
    $region20: #{tpu_custom_call.1} parent=1 // pred_region
      %56 = vst [vmem:[#allocation7] sm:$0xff] 0.0
      %57 = vst [vmem:[#allocation7 + $0x8] sm:$0xff] 0.0
      %58 = vst [vmem:[#allocation7 + $0x10] sm:$0xff] 0.0
      %59 = vst [vmem:[#allocation7 + $0x18] sm:$0xff] 0.0
    $region21: #{tpu_custom_call.1} parent=1 // pred_fallthru
      _
    %v60 = vld [vmem:[#allocation2] sm:$0xff]
    %v61 = vld [vmem:[#allocation2 + $0x8] sm:$0xff]
    %v62 = vld [vmem:[#allocation2 + $0x10] sm:$0xff]
    %v63 = vld [vmem:[#allocation2 + $0x18] sm:$0xff]
    %v64 = vld [vmem:[#allocation2 + $0x20] sm:$0xff]
    %v65 = vld [vmem:[#allocation2 + $0x28] sm:$0xff]
    %v66 = vld [vmem:[#allocation2 + $0x30] sm:$0xff]
    %v67 = vld [vmem:[#allocation2 + $0x38] sm:$0xff]
    %v68 = vld [vmem:[#allocation5] sm:$0xff]
    %v69 = vld [vmem:[#allocation5 + $0x8] sm:$0xff]
    %v70 = vld [vmem:[#allocation5 + $0x10] sm:$0xff]
    %v71 = vld [vmem:[#allocation5 + $0x18] sm:$0xff]
    %v72 = vld [vmem:[#allocation5 + $0x20] sm:$0xff]
    %v73 = vld [vmem:[#allocation5 + $0x28] sm:$0xff]
    %v74 = vld [vmem:[#allocation5 + $0x30] sm:$0xff]
    %v75 = vld [vmem:[#allocation5 + $0x38] sm:$0xff]
    %v76 = vmul.f32 %v68, %v60
    %v77 = vmul.f32 %v69, %v61
    %v78 = vmul.f32 %v70, %v62
    %v79 = vmul.f32 %v71, %v63
    %v80 = vmul.f32 %v72, %v64
    %v81 = vmul.f32 %v73, %v65
    %v82 = vmul.f32 %v74, %v66
    %v83 = vmul.f32 %v75, %v67
    %v84 = vsub.f32 1.0, %v68
    %v85 = vsub.f32 1.0, %v69
    %v86 = vsub.f32 1.0, %v70
    %v87 = vsub.f32 1.0, %v71
    %v88 = vsub.f32 1.0, %v72
    %v89 = vsub.f32 1.0, %v73
    %v90 = vsub.f32 1.0, %v74
    %v91 = vsub.f32 1.0, %v75
    %v92 = vsub.f32 1.0, %v60
    %v93 = vsub.f32 1.0, %v61
    %v94 = vsub.f32 1.0, %v62
    %v95 = vsub.f32 1.0, %v63
    %v96 = vsub.f32 1.0, %v64
    %v97 = vsub.f32 1.0, %v65
    %v98 = vsub.f32 1.0, %v66
    %v99 = vsub.f32 1.0, %v67
    %v100 = vmul.f32 %v84, %v92
    %v101 = vmul.f32 %v85, %v93
    %v102 = vmul.f32 %v86, %v94
    %v103 = vmul.f32 %v87, %v95
    %v104 = vmul.f32 %v88, %v96
    %v105 = vmul.f32 %v89, %v97
    %v106 = vmul.f32 %v90, %v98
    %v107 = vmul.f32 %v91, %v99
    %v108 = vadd.f32 %v76, %v100
    %v109 = vadd.f32 %v77, %v101
    %v110 = vadd.f32 %v78, %v102
    %v111 = vadd.f32 %v79, %v103
    %v112 = vadd.f32 %v80, %v104
    %v113 = vadd.f32 %v81, %v105
    %v114 = vadd.f32 %v82, %v106
    %v115 = vadd.f32 %v83, %v107
    %v116 = vlog2.pop %v60
    %v117 = vmul.f32 %v116, 0.6931472
    %v118 = vlog2.pop %v61
    %v119 = vmul.f32 %v118, 0.6931472
    %v120 = vlog2.pop %v62
    %v121 = vmul.f32 %v120, 0.6931472
    %v122 = vlog2.pop %v63
    %v123 = vmul.f32 %v122, 0.6931472
    %v124 = vlog2.pop %v64
    %v125 = vmul.f32 %v124, 0.6931472
    %v126 = vlog2.pop %v65
    %v127 = vmul.f32 %v126, 0.6931472
    %v128 = vlog2.pop %v66
    %v129 = vmul.f32 %v128, 0.6931472
    %v130 = vlog2.pop %v67
    %v131 = vmul.f32 %v130, 0.6931472
    %v132 = vmax.f32 %v117, -100.0
    %v133 = vmax.f32 %v119, -100.0
    %v134 = vmax.f32 %v121, -100.0
    %v135 = vmax.f32 %v123, -100.0
    %v136 = vmax.f32 %v125, -100.0
    %v137 = vmax.f32 %v127, -100.0
    %v138 = vmax.f32 %v129, -100.0
    %v139 = vmax.f32 %v131, -100.0
    %v140 = vlog2.pop %v92
    %v141 = vmul.f32 %v140, 0.6931472
    %v142 = vlog2.pop %v93
    %v143 = vmul.f32 %v142, 0.6931472
    %v144 = vlog2.pop %v94
    %v145 = vmul.f32 %v144, 0.6931472
    %v146 = vlog2.pop %v95
    %v147 = vmul.f32 %v146, 0.6931472
    %v148 = vlog2.pop %v96
    %v149 = vmul.f32 %v148, 0.6931472
    %v150 = vlog2.pop %v97
    %v151 = vmul.f32 %v150, 0.6931472
    %v152 = vlog2.pop %v98
    %v153 = vmul.f32 %v152, 0.6931472
    %v154 = vlog2.pop %v99
    %v155 = vmul.f32 %v154, 0.6931472
    %v156 = vmax.f32 %v141, -100.0
    %v157 = vmax.f32 %v143, -100.0
    %v158 = vmax.f32 %v145, -100.0
    %v159 = vmax.f32 %v147, -100.0
    %v160 = vmax.f32 %v149, -100.0
    %v161 = vmax.f32 %v151, -100.0
    %v162 = vmax.f32 %v153, -100.0
    %v163 = vmax.f32 %v155, -100.0
    %v164 = vmul.f32 %v68, %v132
    %v165 = vmul.f32 %v69, %v133
    %v166 = vmul.f32 %v70, %v134
    %v167 = vmul.f32 %v71, %v135
    %v168 = vmul.f32 %v72, %v136
    %v169 = vmul.f32 %v73, %v137
    %v170 = vmul.f32 %v74, %v138
    %v171 = vmul.f32 %v75, %v139
    %v172 = vmul.f32 %v84, %v156
    %v173 = vmul.f32 %v85, %v157
    %v174 = vmul.f32 %v86, %v158
    %v175 = vmul.f32 %v87, %v159
    %v176 = vmul.f32 %v88, %v160
    %v177 = vmul.f32 %v89, %v161
    %v178 = vmul.f32 %v90, %v162
    %v179 = vmul.f32 %v91, %v163
    %v180 = vadd.f32 %v164, %v172
    %v181 = vadd.f32 %v165, %v173
    %v182 = vadd.f32 %v166, %v174
    %v183 = vadd.f32 %v167, %v175
    %v184 = vadd.f32 %v168, %v176
    %v185 = vadd.f32 %v169, %v177
    %v186 = vadd.f32 %v170, %v178
    %v187 = vadd.f32 %v171, %v179
    %v188 = vsub.f32 1.0, %v108
    %v189 = vsub.f32 1.0, %v109
    %v190 = vsub.f32 1.0, %v110
    %v191 = vsub.f32 1.0, %v111
    %v192 = vsub.f32 1.0, %v112
    %v193 = vsub.f32 1.0, %v113
    %v194 = vsub.f32 1.0, %v114
    %v195 = vsub.f32 1.0, %v115
    %v196 = vadd.f32 %v188, 1e-08
    %v197 = vadd.f32 %v189, 1e-08
    %v198 = vadd.f32 %v190, 1e-08
    %v199 = vadd.f32 %v191, 1e-08
    %v200 = vadd.f32 %v192, 1e-08
    %v201 = vadd.f32 %v193, 1e-08
    %v202 = vadd.f32 %v194, 1e-08
    %v203 = vadd.f32 %v195, 1e-08
    %v204 = vrsqrt.pop %v196
    %v205 = vmul.f32 %v196, %v204
    %vm206 = vcmp.eq.f32.partialorder %v196, inf
    %v207 = vsel %vm206, %v196, %v205
    %vm208 = vcmp.eq.f32.partialorder %v196, 0.0
    %v209 = vand.u32 %v196, 2147483648
    %v210 = vsel %vm208, %v209, %v207
    %v211 = vrsqrt.pop %v197
    %v212 = vmul.f32 %v197, %v211
    %vm213 = vcmp.eq.f32.partialorder %v197, inf
    %v214 = vsel %vm213, %v197, %v212
    %vm215 = vcmp.eq.f32.partialorder %v197, 0.0
    %v216 = vand.u32 %v197, 2147483648
    %v217 = vsel %vm215, %v216, %v214
    %v218 = vrsqrt.pop %v198
    %v219 = vmul.f32 %v198, %v218
    %vm220 = vcmp.eq.f32.partialorder %v198, inf
    %v221 = vsel %vm220, %v198, %v219
    %vm222 = vcmp.eq.f32.partialorder %v198, 0.0
    %v223 = vand.u32 %v198, 2147483648
    %v224 = vsel %vm222, %v223, %v221
    %v225 = vrsqrt.pop %v199
    %v226 = vmul.f32 %v199, %v225
    %vm227 = vcmp.eq.f32.partialorder %v199, inf
    %v228 = vsel %vm227, %v199, %v226
    %vm229 = vcmp.eq.f32.partialorder %v199, 0.0
    %v230 = vand.u32 %v199, 2147483648
    %v231 = vsel %vm229, %v230, %v228
    %v232 = vrsqrt.pop %v200
    %v233 = vmul.f32 %v200, %v232
    %vm234 = vcmp.eq.f32.partialorder %v200, inf
    %v235 = vsel %vm234, %v200, %v233
    %vm236 = vcmp.eq.f32.partialorder %v200, 0.0
    %v237 = vand.u32 %v200, 2147483648
    %v238 = vsel %vm236, %v237, %v235
    %v239 = vrsqrt.pop %v201
    %v240 = vmul.f32 %v201, %v239
    %vm241 = vcmp.eq.f32.partialorder %v201, inf
    %v242 = vsel %vm241, %v201, %v240
    %vm243 = vcmp.eq.f32.partialorder %v201, 0.0
    %v244 = vand.u32 %v201, 2147483648
    %v245 = vsel %vm243, %v244, %v242
    %v246 = vrsqrt.pop %v202
    %v247 = vmul.f32 %v202, %v246
    %vm248 = vcmp.eq.f32.partialorder %v202, inf
    %v249 = vsel %vm248, %v202, %v247
    %vm250 = vcmp.eq.f32.partialorder %v202, 0.0
    %v251 = vand.u32 %v202, 2147483648
    %v252 = vsel %vm250, %v251, %v249
    %v253 = vrsqrt.pop %v203
    %v254 = vmul.f32 %v203, %v253
    %vm255 = vcmp.eq.f32.partialorder %v203, inf
    %v256 = vsel %vm255, %v203, %v254
    %vm257 = vcmp.eq.f32.partialorder %v203, 0.0
    %v258 = vand.u32 %v203, 2147483648
    %v259 = vsel %vm257, %v258, %v256
    %v260 = vmul.f32 %v210, %v180
    %v261 = vmul.f32 %v217, %v181
    %v262 = vmul.f32 %v224, %v182
    %v263 = vmul.f32 %v231, %v183
    %v264 = vmul.f32 %v238, %v184
    %v265 = vmul.f32 %v245, %v185
    %v266 = vmul.f32 %v252, %v186
    %v267 = vmul.f32 %v259, %v187
    %v268 = vadd.f32 %v260, %v261
    %v269 = vadd.f32 %v268, %v262
    %v270 = vadd.f32 %v269, %v263
    %v271 = vadd.f32 %v270, %v264
    %v272 = vadd.f32 %v271, %v265
    %v273 = vadd.f32 %v272, %v266
    %v274 = vadd.f32 %v273, %v267
    %v275 = vadd.f32 %v76, %v77
    %v276 = vadd.f32 %v275, %v78
    %v277 = vadd.f32 %v276, %v79
    %v278 = vadd.f32 %v277, %v80
    %v279 = vadd.f32 %v278, %v81
    %v280 = vadd.f32 %v279, %v82
    %v281 = vadd.f32 %v280, %v83
    %v282 = vadd.f32 %v60, %v61
    %v283 = vadd.f32 %v282, %v62
    %v284 = vadd.f32 %v283, %v63
    %v285 = vadd.f32 %v284, %v64
    %v286 = vadd.f32 %v285, %v65
    %v287 = vadd.f32 %v286, %v66
    %v288 = vadd.f32 %v287, %v67
    %v289 = vadd.f32 %v68, %v69
    %v290 = vadd.f32 %v289, %v70
    %v291 = vadd.f32 %v290, %v71
    %v292 = vadd.f32 %v291, %v72
    %v293 = vadd.f32 %v292, %v73
    %v294 = vadd.f32 %v293, %v74
    %v295 = vadd.f32 %v294, %v75
    %v296 = vadd.f32 %v274, 0.0
    %v297 = vadd.f32 %v281, 0.0
    %v298 = vadd.f32 %v288, 0.0
    %v299 = vadd.f32 %v295, 0.0
    %v300 = vld [vmem:[#allocation7] sm:$0xff]
    %v301 = vadd.f32 %v300, %v296
    %302 = vst [vmem:[#allocation7] sm:$0xff] %v301
    %s303 = scalar_lea.vmem [#allocation7], 8
    %v304 = vld [vmem:[%s303] sm:$0xff]
    %v305 = vadd.f32 %v304, %v297
    %306 = vst [vmem:[%s303] sm:$0xff] %v305
    %s307 = scalar_lea.vmem [#allocation7], 16
    %v308 = vld [vmem:[%s307] sm:$0xff]
    %v309 = vadd.f32 %v308, %v298
    %310 = vst [vmem:[%s307] sm:$0xff] %v309
    %s311 = scalar_lea.vmem [#allocation7], 24
    %v312 = vld [vmem:[%s311] sm:$0xff]
    %v313 = vadd.f32 %v312, %v299
    %314 = vst [vmem:[%s311] sm:$0xff] %v313
    // Predicated region
    $region22: #{tpu_custom_call.1} parent=1 // pred_check
      _
    $region23: #{tpu_custom_call.1} parent=1 // pred_check_branch
      %316 = sbr.rel (0) target = $region25
    $region24: #{tpu_custom_call.1} parent=1 // pred_region
      %s318 = ssub.s32 512, 512
      %319 = vsyncadd [#allocation4], %s318
      %s320 = sshll.u32 [#allocation7], 4
      %s321 = int_to_ptr.vmem [resolvable:$true] %s320
      %326 = dma.vmem_to_hbm [thread:$0]  %s321, 512, %s2, [#allocation4], 128, 128, 8
    $region25: #{tpu_custom_call.1} parent=1 // pred_fallthru
      _
    // Predicated region
    $region26: #{tpu_custom_call.1} parent=1 // pred_check
      _
    $region27: #{tpu_custom_call.1} parent=1 // pred_check_branch
      %328 = sbr.rel (0) target = $region29
    $region28: #{tpu_custom_call.1} parent=1 // pred_region
      %329 = dma.done [#allocation4], 512
    $region29: #{tpu_custom_call.1} parent=1 // pred_fallthru
      _
    %330 = vsyncpa [#allocation3], 1
    %331 = vsyncpa [#allocation6], 1
    %332 = vsyncpa [#allocation4], 1

</llo_original>
